<compile_context>
chip_gen: v7x
topology: tpu7x:2x2x1
jax: 0.10.0
libtpu: 0.0.40
codegen_flags: <defaults>
</compile_context>

<pallas_src>
import jax
import jax.numpy as jnp
from jax.experimental import pallas as pl
from jax.experimental.pallas import tpu as pltpu

_FOLD = 8              # batch rows folded into K (8 * input_dim=32 -> 256-deep MXU)
_BLOCK_ROWS = 16384    # unfolded batch rows per grid step (x tile = 2 MiB f32)
_VMEM_LIMIT = 48 * 1024 * 1024


def _fc1_kernel(xf_ref, w1f_ref, b1f_ref, w2f_ref, b2_ref, o_ref):
    # fc1 on the MXU: (TBf, FOLD*D) @ block-diag (FOLD*D, FOLD*H), bf16 inputs,
    # f32 accumulate.  Lane segment j of folded row r holds the hidden units of
    # original batch row FOLD*r + j (block-diagonal W1 keeps rows independent).
    xf = xf_ref[...].astype(jnp.bfloat16)
    h = jnp.dot(xf, w1f_ref[...], preferred_element_type=jnp.float32)
    h = jnp.maximum(h + b1f_ref[...], 0.0)
    # fc2: the 58-lane segmented reduce expressed as a second block-diagonal
    # matmul (FOLD*H, FOLD) -> lane-dense (TBf, FOLD) output, no XLU relayout.
    o = jnp.dot(h.astype(jnp.bfloat16), w2f_ref[...],
                preferred_element_type=jnp.float32)
    o_ref[...] = (o + b2_ref[0]).astype(o_ref.dtype)


def prepare_fc1_params(w1, b1, w2, b2):
    """One-time conversion from PyTorch nn.Linear layout to kernel layout.

    Args:
      w1: (hidden, input_dim)   b1: (hidden,)
      w2: (1, hidden)           b2: (1,)
    Returns (w1f, b1f, w2f, b2s):
      w1f: (FOLD*input_dim, FOLD*hidden) bf16 block-diagonal fc1 weight
      b1f: (1, FOLD*hidden)              f32  tiled fc1 bias
      w2f: (FOLD*hidden, FOLD)           bf16 block-diagonal fc2 weight
      b2s: (1,)                          f32  fc2 bias (SMEM scalar)
    """
    w1 = jnp.asarray(w1, jnp.float32)
    b1 = jnp.asarray(b1, jnp.float32)
    w2 = jnp.asarray(w2, jnp.float32)
    b2 = jnp.asarray(b2, jnp.float32)
    eye = jnp.eye(_FOLD, dtype=jnp.float32)
    w1f = jnp.kron(eye, jnp.transpose(w1)).astype(jnp.bfloat16)   # (FOLD*D, FOLD*H)
    b1f = jnp.tile(b1.reshape(1, -1), (1, _FOLD))                 # (1, FOLD*H)
    w2f = jnp.kron(eye, w2.reshape(-1, 1)).astype(jnp.bfloat16)   # (FOLD*H, FOLD)
    b2s = b2.reshape(1)                                           # (1,)
    return w1f, b1f, w2f, b2s


def _choose_block(n_folded):
    """Folded-row tile size: capped so 2x-buffered x + lane-padded activations
    stay well under VMEM on every generation; >=2 grid steps whenever possible
    (v7x two-TensorCore split); 8-aligned or full-extent for the (8,128) rule."""
    max_tbf = _BLOCK_ROWS // _FOLD
    if n_folded > max_tbf:
        return max_tbf
    half = ((n_folded + 1) // 2 + 7) // 8 * 8
    if 0 < half < n_folded:
        return half
    return n_folded


@jax.jit
def fc1_forward(x, w1f, b1f, w2f, b2s):
    """Forward pass of FC1.

    Args:
      x:    (B, input_dim) float32
      w1f, b1f, w2f, b2s: kernel-layout params from prepare_fc1_params().
    Returns:
      (B,) float32 — matches x.view(-1) in the PyTorch module.
    """
    B, D = x.shape
    H = w1f.shape[1] // _FOLD

    # Fold _FOLD batch rows into the K dimension.  The reshape is a free
    # row-major bitcast; the pad copy is only paid when B % _FOLD != 0.
    b_pad = pl.cdiv(B, _FOLD) * _FOLD
    if b_pad != B:
        x = jnp.pad(x, ((0, b_pad - B), (0, 0)))
    n_folded = b_pad // _FOLD
    xf = x.reshape(n_folded, _FOLD * D)

    tbf = _choose_block(n_folded)
    grid = (pl.cdiv(n_folded, tbf),)

    out2d = pl.pallas_call(
        _fc1_kernel,
        out_shape=jax.ShapeDtypeStruct((n_folded, _FOLD), jnp.float32),
        grid=grid,
        in_specs=[
            pl.BlockSpec((tbf, _FOLD * D), lambda i: (i, 0)),        # x: batch-tiled
            pl.BlockSpec((_FOLD * D, _FOLD * H), lambda i: (0, 0)),  # w1f: VMEM-resident
            pl.BlockSpec((1, _FOLD * H), lambda i: (0, 0)),          # b1f: VMEM-resident
            pl.BlockSpec((_FOLD * H, _FOLD), lambda i: (0, 0)),      # w2f: VMEM-resident
            pl.BlockSpec(memory_space=pltpu.MemorySpace.SMEM),       # b2 scalar
        ],
        out_specs=pl.BlockSpec((tbf, _FOLD), lambda i: (i, 0)),      # lane-dense tile
        compiler_params=pltpu.CompilerParams(
            dimension_semantics=("parallel",),   # batch axis split across TCs
            vmem_limit_bytes=_VMEM_LIMIT,
        ),
    )(xf, w1f, b1f, w2f, b2s)

    # (n_folded, FOLD) -> (b_pad,) is a free row-major reshape; drop fold padding.
    return out2d.reshape(-1)[:B]


def _pytorch_linear_init(key, out_features, in_features):
    """Deterministic init matching nn.Linear's default (uniform +/- 1/sqrt(fan_in))."""
    kw, kb = jax.random.split(key)
    bound = 1.0 / float(in_features) ** 0.5
    w = jax.random.uniform(kw, (out_features, in_features), jnp.float32,
                           minval=-bound, maxval=bound)
    b = jax.random.uniform(kb, (out_features,), jnp.float32,
                           minval=-bound, maxval=bound)
    return w, b


def _reference(x, w1, b1, w2, b2):
    # Mirrors the PyTorch forward in plain f32 JAX.
    return (jnp.maximum(x @ w1.T + b1, 0.0) @ w2.T + b2).reshape(-1)


if __name__ == "__main__":
    input_dim = 32
    hidden = 58

    key = jax.random.PRNGKey(0)
    k_x, k_fc1, k_fc2 = jax.random.split(key, 3)

    w1, b1 = _pytorch_linear_init(k_fc1, hidden, input_dim)
    w2, b2 = _pytorch_linear_init(k_fc2, 1, hidden)
    params = prepare_fc1_params(w1, b1, w2, b2)

    # bf16 MXU inputs with f32 accumulation -> loosen tolerance vs. f32 ref.
    tol = dict(atol=3e-2, rtol=3e-2)

    # Small primary case, plus ragged/multi-tile cases exercising fold padding,
    # a multi-block grid, and the partial final tile (per correctness review).
    for batch in (8, 300, 2 * _BLOCK_ROWS + 17):
        x = jax.random.normal(jax.random.fold_in(k_x, batch),
                              (batch, input_dim), jnp.float32)
        y = jax.block_until_ready(fc1_forward(x, *params))
        ref = _reference(x, w1, b1, w2, b2)
        assert y.shape == (batch,), (y.shape, batch)
        assert jnp.allclose(y, ref, **tol), float(jnp.max(jnp.abs(y - ref)))

    print("KERNEL_OK")
</pallas_src>

<mosaic_0001>
module attributes {stable_mosaic.version = 11 : i64} {
  func.func @_fc1_kernel(%arg0: i32, %arg1: memref<1x256xf32, #tpu.memory_space<vmem>>, %arg2: memref<256x464xbf16, #tpu.memory_space<vmem>>, %arg3: memref<1x464xf32, #tpu.memory_space<vmem>>, %arg4: memref<464x8xbf16, #tpu.memory_space<vmem>>, %arg5: memref<1xf32, #tpu.memory_space<smem>>, %arg6: memref<1x8xf32, #tpu.memory_space<vmem>>) attributes {dimension_semantics = [#tpu.dimension_semantics<parallel>], iteration_bounds = array<i64: 1>, scalar_prefetch = 0 : i64, scratch_operands = 0 : i64, tpu.core_type = #tpu.core_type<tc>, window_params = [{transform_indices = @transform_0, window_bounds = array<i64: 1, 256>}, {pipeline_mode = #tpu.pipeline_mode<synchronous>, transform_indices = @transform_1, window_bounds = array<i64: 256, 464>}, {pipeline_mode = #tpu.pipeline_mode<synchronous>, transform_indices = @transform_2, window_bounds = array<i64: 1, 464>}, {pipeline_mode = #tpu.pipeline_mode<synchronous>, transform_indices = @transform_3, window_bounds = array<i64: 464, 8>}, {transform_indices = @transform_4, window_bounds = array<i64: 1>}, {transform_indices = @transform_5, window_bounds = array<i64: 1, 8>}]} {
    %c0 = arith.constant 0 : index
    %c0_0 = arith.constant 0 : index
    %0 = vector.load %arg1[%c0, %c0_0] : memref<1x256xf32, #tpu.memory_space<vmem>>, vector<1x256xf32>
    %1 = arith.truncf %0 : vector<1x256xf32> to vector<1x256xbf16>
    %c0_1 = arith.constant 0 : index
    %c0_2 = arith.constant 0 : index
    %2 = vector.load %arg2[%c0_1, %c0_2] : memref<256x464xbf16, #tpu.memory_space<vmem>>, vector<256x464xbf16>
    %cst = arith.constant dense<0.000000e+00> : vector<1x464xf32>
    %3 = tpu.matmul %1, %2, %cst {dimension_numbers = #tpu.dot_dimension_numbers<[1], [0], [0], [1], [0, 0, 1, 1], [], []>} : vector<1x256xbf16>, vector<256x464xbf16>, vector<1x464xf32> -> vector<1x464xf32>
    %c0_3 = arith.constant 0 : index
    %c0_4 = arith.constant 0 : index
    %4 = vector.load %arg3[%c0_3, %c0_4] : memref<1x464xf32, #tpu.memory_space<vmem>>, vector<1x464xf32>
    %5 = arith.addf %3, %4 : vector<1x464xf32>
    %cst_5 = arith.constant 0.000000e+00 : f32
    %6 = vector.broadcast %cst_5 : f32 to vector<1x464xf32>
    %7 = arith.maximumf %5, %6 : vector<1x464xf32>
    %8 = arith.truncf %7 : vector<1x464xf32> to vector<1x464xbf16>
    %c0_6 = arith.constant 0 : index
    %c0_7 = arith.constant 0 : index
    %9 = vector.load %arg4[%c0_6, %c0_7] : memref<464x8xbf16, #tpu.memory_space<vmem>>, vector<464x8xbf16>
    %cst_8 = arith.constant dense<0.000000e+00> : vector<1x8xf32>
    %10 = tpu.matmul %8, %9, %cst_8 {dimension_numbers = #tpu.dot_dimension_numbers<[1], [0], [0], [1], [0, 0, 1, 1], [], []>} : vector<1x464xbf16>, vector<464x8xbf16>, vector<1x8xf32> -> vector<1x8xf32>
    %c0_9 = arith.constant 0 : index
    %11 = memref.load %arg5[%c0_9] : memref<1xf32, #tpu.memory_space<smem>>
    %12 = vector.broadcast %11 : f32 to vector<1x8xf32>
    %13 = arith.addf %10, %12 : vector<1x8xf32>
    %c0_10 = arith.constant 0 : index
    %c0_11 = arith.constant 0 : index
    %14 = vector.load %arg6[%c0_10, %c0_11] : memref<1x8xf32, #tpu.memory_space<vmem>>, vector<1x8xf32>
    tpu.vector_store %arg6[%c0_10, %c0_11], %13 {strides = array<i32>} : memref<1x8xf32, #tpu.memory_space<vmem>>, vector<1x8xf32>,
    return
  }
  func.func @transform_0(%arg0: i32) -> (i32, i32) {
    %c0_i32 = arith.constant 0 : i32
    %c0_i32_0 = arith.constant 0 : i32
    return %arg0, %c0_i32 : i32, i32
  }
  func.func @transform_1(%arg0: i32) -> (i32, i32) {
    %c0_i32 = arith.constant 0 : i32
    %c0_i32_0 = arith.constant 0 : i32
    %c0_i32_1 = arith.constant 0 : i32
    return %c0_i32, %c0_i32_0 : i32, i32
  }
  func.func @transform_2(%arg0: i32) -> (i32, i32) {
    %c0_i32 = arith.constant 0 : i32
    %c0_i32_0 = arith.constant 0 : i32
    %c0_i32_1 = arith.constant 0 : i32
    return %c0_i32, %c0_i32_0 : i32, i32
  }
  func.func @transform_3(%arg0: i32) -> (i32, i32) {
    %c0_i32 = arith.constant 0 : i32
    %c0_i32_0 = arith.constant 0 : i32
    %c0_i32_1 = arith.constant 0 : i32
    return %c0_i32, %c0_i32_0 : i32, i32
  }
  func.func @transform_4(%arg0: i32) -> i32 {
    %c0_i32 = arith.constant 0 : i32
    %c0_i32_0 = arith.constant 0 : i32
    return %c0_i32 : i32
  }
  func.func @transform_5(%arg0: i32) -> (i32, i32) {
    %c0_i32 = arith.constant 0 : i32
    %c0_i32_0 = arith.constant 0 : i32
    return %arg0, %c0_i32 : i32, i32
  }
}

</mosaic_0001>

<llo_original>
// kernel: fc1_forward.1
$region0: #{fc1_forward.1}
  #allocation0 [shape = 'u32[]', space=smem, size = 0x4, offset = 0x4, fixed_abs, tag = 'smem constant byte address 0x4 - core index']
  #allocation1 [shape = 'u32[144,128]{1,0:T(1,128)}', space=vmem, size = 0x12000, scoped, tag = 'internal scratch']
  #allocation2 [shape = 'f32[1]{0:T(128)S(6)}', space=smem, size = 0x200, scoped, tag = 'scoped memory for fc1_forward.1']
  %s0 = inlined_call_operand.vmem [shape: f32[1,256], index: 0, kind: input, shape index: {}]
  %s1 = inlined_call_operand.vmem [shape: bf16[256,464], index: 1, kind: input, shape index: {}]
  %s2 = inlined_call_operand.vmem [shape: f32[1,464], index: 2, kind: input, shape index: {}]
  %s3 = inlined_call_operand.vmem [shape: bf16[464,8], index: 3, kind: input, shape index: {}]
  %s4 = inlined_call_operand.<no memory space> [shape: f32[1], index: 4, kind: input, shape index: {}]
  %s5 = inlined_call_operand.hbm [shape: f32[1,8], index: 5, kind: output, shape index: {}]
  %s6 = sld [smem:[#allocation0]]
  $region30: #{fc1_forward.1} parent=0
    _
  %s8 = ssub.s32 1, %s6
  %s9 = scalar_select 0, %s8, %s6
  %10 = sst [smem:[#allocation2]] %s4
  $region1: #{fc1_forward.1} parent=0
    #allocation3 [shape = 'u8[512]{0}', space=vmem, size = 0x400, scoped, tag = 'output window, operand 0, single buffered']
    #allocation4 [shape = 's32[1]{0}', space=sflag, size = 0x4, scoped, tag = 'scoped memory for fc1_forward.1']
    %11 = vsyncpa [#allocation4], 0
    // Predicated region
    $region2: #{fc1_forward.1} parent=1 // pred_check
      _
    $region3: #{fc1_forward.1} parent=1 // pred_check_branch
      %13 = sbr.rel (0) target = $region5
    $region4: #{fc1_forward.1} parent=1 // pred_region
      _
    $region5: #{fc1_forward.1} parent=1 // pred_fallthru
      _
    // Predicated region
    $region6: #{fc1_forward.1} parent=1 // pred_check
      _
    $region7: #{fc1_forward.1} parent=1 // pred_check_branch
      %15 = sbr.rel (0) target = $region9
    $region8: #{fc1_forward.1} parent=1 // pred_region
      _
    $region9: #{fc1_forward.1} parent=1 // pred_fallthru
      _
    // Predicated region
    $region10: #{fc1_forward.1} parent=1 // pred_check
      _
    $region11: #{fc1_forward.1} parent=1 // pred_check_branch
      %17 = sbr.rel (0) target = $region13
    $region12: #{fc1_forward.1} parent=1 // pred_region
      _
    $region13: #{fc1_forward.1} parent=1 // pred_fallthru
      _
    // Predicated region
    $region14: #{fc1_forward.1} parent=1 // pred_check
      _
    $region15: #{fc1_forward.1} parent=1 // pred_check_branch
      %19 = sbr.rel (0) target = $region17
    $region16: #{fc1_forward.1} parent=1 // pred_region
      _
    $region17: #{fc1_forward.1} parent=1 // pred_fallthru
      _
    // Predicated region
    $region18: #{fc1_forward.1} parent=1 // pred_check
      _
    $region19: #{fc1_forward.1} parent=1 // pred_check_branch
      %21 = sbr.rel (0) target = $region21
    $region20: #{fc1_forward.1} parent=1 // pred_region
      _
    $region21: #{fc1_forward.1} parent=1 // pred_fallthru
      _
    %v23 = vld [vmem:[%s0] sm:$0x3]
    %v25 = vlaneseq
    %v26 = vshrl.u32 %v25, 7
    %v27 = vsub.s32 0, %v26
    %v28 = vrot.slane %v23, %v27
    %v29 = vlaneseq
    %v30 = vshrl.u32 %v29, 7
    %v31 = vsub.s32 1, %v30
    %v32 = vrot.slane %v23, %v31
    %v35 = vpack.c.bf16 %v28, %v28
    %v36 = vpack.c.bf16 %v32, %v32
    %v37 = vld [vmem:[%s1] sm:$0xff]
    %v38 = vld [vmem:[%s1 + $0x8] sm:$0xff]
    %v39 = vld [vmem:[%s1 + $0x10] sm:$0xff]
    %v40 = vld [vmem:[%s1 + $0x18] sm:$0xff]
    %v41 = vld [vmem:[%s1 + $0x20] sm:$0xff]
    %v42 = vld [vmem:[%s1 + $0x28] sm:$0xff]
    %v43 = vld [vmem:[%s1 + $0x30] sm:$0xff]
    %v44 = vld [vmem:[%s1 + $0x38] sm:$0xff]
    %v45 = vld [vmem:[%s1 + $0x40] sm:$0xff]
    %v46 = vld [vmem:[%s1 + $0x48] sm:$0xff]
    %v47 = vld [vmem:[%s1 + $0x50] sm:$0xff]
    %v48 = vld [vmem:[%s1 + $0x58] sm:$0xff]
    %v49 = vld [vmem:[%s1 + $0x60] sm:$0xff]
    %v50 = vld [vmem:[%s1 + $0x68] sm:$0xff]
    %v51 = vld [vmem:[%s1 + $0x70] sm:$0xff]
    %v52 = vld [vmem:[%s1 + $0x78] sm:$0xff]
    %v53 = vld [vmem:[%s1 + $0x80] sm:$0xff]
    %v54 = vld [vmem:[%s1 + $0x88] sm:$0xff]
    %v55 = vld [vmem:[%s1 + $0x90] sm:$0xff]
    %v56 = vld [vmem:[%s1 + $0x98] sm:$0xff]
    %v57 = vld [vmem:[%s1 + $0xa0] sm:$0xff]
    %v58 = vld [vmem:[%s1 + $0xa8] sm:$0xff]
    %v59 = vld [vmem:[%s1 + $0xb0] sm:$0xff]
    %v60 = vld [vmem:[%s1 + $0xb8] sm:$0xff]
    %v61 = vld [vmem:[%s1 + $0xc0] sm:$0xff]
    %v62 = vld [vmem:[%s1 + $0xc8] sm:$0xff]
    %v63 = vld [vmem:[%s1 + $0xd0] sm:$0xff]
    %v64 = vld [vmem:[%s1 + $0xd8] sm:$0xff]
    %v65 = vld [vmem:[%s1 + $0xe0] sm:$0xff]
    %v66 = vld [vmem:[%s1 + $0xe8] sm:$0xff]
    %v67 = vld [vmem:[%s1 + $0xf0] sm:$0xff]
    %v68 = vld [vmem:[%s1 + $0xf8] sm:$0xff]
    %v69 = vld [vmem:[%s1 + $0x100] sm:$0xff]
    %v70 = vld [vmem:[%s1 + $0x108] sm:$0xff]
    %v71 = vld [vmem:[%s1 + $0x110] sm:$0xff]
    %v72 = vld [vmem:[%s1 + $0x118] sm:$0xff]
    %v73 = vld [vmem:[%s1 + $0x120] sm:$0xff]
    %v74 = vld [vmem:[%s1 + $0x128] sm:$0xff]
    %v75 = vld [vmem:[%s1 + $0x130] sm:$0xff]
    %v76 = vld [vmem:[%s1 + $0x138] sm:$0xff]
    %v77 = vld [vmem:[%s1 + $0x140] sm:$0xff]
    %v78 = vld [vmem:[%s1 + $0x148] sm:$0xff]
    %v79 = vld [vmem:[%s1 + $0x150] sm:$0xff]
    %v80 = vld [vmem:[%s1 + $0x158] sm:$0xff]
    %v81 = vld [vmem:[%s1 + $0x160] sm:$0xff]
    %v82 = vld [vmem:[%s1 + $0x168] sm:$0xff]
    %v83 = vld [vmem:[%s1 + $0x170] sm:$0xff]
    %v84 = vld [vmem:[%s1 + $0x178] sm:$0xff]
    %v85 = vld [vmem:[%s1 + $0x180] sm:$0xff]
    %v86 = vld [vmem:[%s1 + $0x188] sm:$0xff]
    %v87 = vld [vmem:[%s1 + $0x190] sm:$0xff]
    %v88 = vld [vmem:[%s1 + $0x198] sm:$0xff]
    %v89 = vld [vmem:[%s1 + $0x1a0] sm:$0xff]
    %v90 = vld [vmem:[%s1 + $0x1a8] sm:$0xff]
    %v91 = vld [vmem:[%s1 + $0x1b0] sm:$0xff]
    %v92 = vld [vmem:[%s1 + $0x1b8] sm:$0xff]
    %v93 = vld [vmem:[%s1 + $0x1c0] sm:$0xff]
    %v94 = vld [vmem:[%s1 + $0x1c8] sm:$0xff]
    %v95 = vld [vmem:[%s1 + $0x1d0] sm:$0xff]
    %v96 = vld [vmem:[%s1 + $0x1d8] sm:$0xff]
    %v97 = vld [vmem:[%s1 + $0x1e0] sm:$0xff]
    %v98 = vld [vmem:[%s1 + $0x1e8] sm:$0xff]
    %v99 = vld [vmem:[%s1 + $0x1f0] sm:$0xff]
    %v100 = vld [vmem:[%s1 + $0x1f8] sm:$0xff]
    %v101 = vld [vmem:[%s2] sm:$0xf]
    %v166 = vunpack.c.l.b16 %v37
    %v167 = vunpack.c.h.b16 %v37
    %v168 = vunpack.c.l.b16 %v38
    %v169 = vunpack.c.h.b16 %v38
    %v170 = vunpack.c.l.b16 %v39
    %v171 = vunpack.c.h.b16 %v39
    %v172 = vunpack.c.l.b16 %v40
    %v173 = vunpack.c.h.b16 %v40
    %v174 = vunpack.c.l.b16 %v41
    %v175 = vunpack.c.h.b16 %v41
    %v176 = vunpack.c.l.b16 %v42
    %v177 = vunpack.c.h.b16 %v42
    %v178 = vunpack.c.l.b16 %v43
    %v179 = vunpack.c.h.b16 %v43
    %v180 = vunpack.c.l.b16 %v44
    %v181 = vunpack.c.h.b16 %v44
    %v182 = vunpack.c.l.b16 %v45
    %v183 = vunpack.c.h.b16 %v45
    %v184 = vunpack.c.l.b16 %v46
    %v185 = vunpack.c.h.b16 %v46
    %v186 = vunpack.c.l.b16 %v47
    %v187 = vunpack.c.h.b16 %v47
    %v188 = vunpack.c.l.b16 %v48
    %v189 = vunpack.c.h.b16 %v48
    %v190 = vunpack.c.l.b16 %v49
    %v191 = vunpack.c.h.b16 %v49
    %v192 = vunpack.c.l.b16 %v50
    %v193 = vunpack.c.h.b16 %v50
    %v194 = vunpack.c.l.b16 %v51
    %v195 = vunpack.c.h.b16 %v51
    %v196 = vunpack.c.l.b16 %v52
    %v197 = vunpack.c.h.b16 %v52
    %v198 = vunpack.c.l.b16 %v53
    %v199 = vunpack.c.h.b16 %v53
    %v200 = vunpack.c.l.b16 %v54
    %v201 = vunpack.c.h.b16 %v54
    %v202 = vunpack.c.l.b16 %v55
    %v203 = vunpack.c.h.b16 %v55
    %v204 = vunpack.c.l.b16 %v56
    %v205 = vunpack.c.h.b16 %v56
    %v206 = vunpack.c.l.b16 %v57
    %v207 = vunpack.c.h.b16 %v57
    %v208 = vunpack.c.l.b16 %v58
    %v209 = vunpack.c.h.b16 %v58
    %v210 = vunpack.c.l.b16 %v59
    %v211 = vunpack.c.h.b16 %v59
    %v212 = vunpack.c.l.b16 %v60
    %v213 = vunpack.c.h.b16 %v60
    %v214 = vunpack.c.l.b16 %v61
    %v215 = vunpack.c.h.b16 %v61
    %v216 = vunpack.c.l.b16 %v62
    %v217 = vunpack.c.h.b16 %v62
    %v218 = vunpack.c.l.b16 %v63
    %v219 = vunpack.c.h.b16 %v63
    %v220 = vunpack.c.l.b16 %v64
    %v221 = vunpack.c.h.b16 %v64
    %v222 = vunpack.c.l.b16 %v65
    %v223 = vunpack.c.h.b16 %v65
    %v224 = vunpack.c.l.b16 %v66
    %v225 = vunpack.c.h.b16 %v66
    %v226 = vunpack.c.l.b16 %v67
    %v227 = vunpack.c.h.b16 %v67
    %v228 = vunpack.c.l.b16 %v68
    %v229 = vunpack.c.h.b16 %v68
    %v230 = vunpack.c.l.b16 %v69
    %v231 = vunpack.c.h.b16 %v69
    %v232 = vunpack.c.l.b16 %v70
    %v233 = vunpack.c.h.b16 %v70
    %v234 = vunpack.c.l.b16 %v71
    %v235 = vunpack.c.h.b16 %v71
    %v236 = vunpack.c.l.b16 %v72
    %v237 = vunpack.c.h.b16 %v72
    %v238 = vunpack.c.l.b16 %v73
    %v239 = vunpack.c.h.b16 %v73
    %v240 = vunpack.c.l.b16 %v74
    %v241 = vunpack.c.h.b16 %v74
    %v242 = vunpack.c.l.b16 %v75
    %v243 = vunpack.c.h.b16 %v75
    %v244 = vunpack.c.l.b16 %v76
    %v245 = vunpack.c.h.b16 %v76
    %v246 = vunpack.c.l.b16 %v77
    %v247 = vunpack.c.h.b16 %v77
    %v248 = vunpack.c.l.b16 %v78
    %v249 = vunpack.c.h.b16 %v78
    %v250 = vunpack.c.l.b16 %v79
    %v251 = vunpack.c.h.b16 %v79
    %v252 = vunpack.c.l.b16 %v80
    %v253 = vunpack.c.h.b16 %v80
    %v254 = vunpack.c.l.b16 %v81
    %v255 = vunpack.c.h.b16 %v81
    %v256 = vunpack.c.l.b16 %v82
    %v257 = vunpack.c.h.b16 %v82
    %v258 = vunpack.c.l.b16 %v83
    %v259 = vunpack.c.h.b16 %v83
    %v260 = vunpack.c.l.b16 %v84
    %v261 = vunpack.c.h.b16 %v84
    %v262 = vunpack.c.l.b16 %v85
    %v263 = vunpack.c.h.b16 %v85
    %v264 = vunpack.c.l.b16 %v86
    %v265 = vunpack.c.h.b16 %v86
    %v266 = vunpack.c.l.b16 %v87
    %v267 = vunpack.c.h.b16 %v87
    %v268 = vunpack.c.l.b16 %v88
    %v269 = vunpack.c.h.b16 %v88
    %v270 = vunpack.c.l.b16 %v89
    %v271 = vunpack.c.h.b16 %v89
    %v272 = vunpack.c.l.b16 %v90
    %v273 = vunpack.c.h.b16 %v90
    %v274 = vunpack.c.l.b16 %v91
    %v275 = vunpack.c.h.b16 %v91
    %v276 = vunpack.c.l.b16 %v92
    %v277 = vunpack.c.h.b16 %v92
    %v278 = vunpack.c.l.b16 %v93
    %v279 = vunpack.c.h.b16 %v93
    %v280 = vunpack.c.l.b16 %v94
    %v281 = vunpack.c.h.b16 %v94
    %v282 = vunpack.c.l.b16 %v95
    %v283 = vunpack.c.h.b16 %v95
    %v284 = vunpack.c.l.b16 %v96
    %v285 = vunpack.c.h.b16 %v96
    %v286 = vunpack.c.l.b16 %v97
    %v287 = vunpack.c.h.b16 %v97
    %v288 = vunpack.c.l.b16 %v98
    %v289 = vunpack.c.h.b16 %v98
    %v290 = vunpack.c.l.b16 %v99
    %v291 = vunpack.c.h.b16 %v99
    %v292 = vunpack.c.l.b16 %v100
    %v293 = vunpack.c.h.b16 %v100
    %v294 = vpack.c.b16 %v170, %v166
    %v295 = vpack.c.b16 %v171, %v167
    %v296 = vpack.c.b16 %v172, %v168
    %v297 = vpack.c.b16 %v173, %v169
    %v298 = vpack.c.b16 %v178, %v174
    %v299 = vpack.c.b16 %v179, %v175
    %v300 = vpack.c.b16 %v180, %v176
    %v301 = vpack.c.b16 %v181, %v177
    %v302 = vpack.c.b16 %v186, %v182
    %v303 = vpack.c.b16 %v187, %v183
    %v304 = vpack.c.b16 %v188, %v184
    %v305 = vpack.c.b16 %v189, %v185
    %v306 = vpack.c.b16 %v194, %v190
    %v307 = vpack.c.b16 %v195, %v191
    %v308 = vpack.c.b16 %v196, %v192
    %v309 = vpack.c.b16 %v197, %v193
    %v310 = vpack.c.b16 %v202, %v198
    %v311 = vpack.c.b16 %v203, %v199
    %v312 = vpack.c.b16 %v204, %v200
    %v313 = vpack.c.b16 %v205, %v201
    %v314 = vpack.c.b16 %v210, %v206
    %v315 = vpack.c.b16 %v211, %v207
    %v316 = vpack.c.b16 %v212, %v208
    %v317 = vpack.c.b16 %v213, %v209
    %v318 = vpack.c.b16 %v218, %v214
    %v319 = vpack.c.b16 %v219, %v215
    %v320 = vpack.c.b16 %v220, %v216
    %v321 = vpack.c.b16 %v221, %v217
    %v322 = vpack.c.b16 %v226, %v222
    %v323 = vpack.c.b16 %v227, %v223
    %v324 = vpack.c.b16 %v228, %v224
    %v325 = vpack.c.b16 %v229, %v225
    %v326 = vpack.c.b16 %v234, %v230
    %v327 = vpack.c.b16 %v235, %v231
    %v328 = vpack.c.b16 %v236, %v232
    %v329 = vpack.c.b16 %v237, %v233
    %v330 = vpack.c.b16 %v242, %v238
    %v331 = vpack.c.b16 %v243, %v239
    %v332 = vpack.c.b16 %v244, %v240
    %v333 = vpack.c.b16 %v245, %v241
    %v334 = vpack.c.b16 %v250, %v246
    %v335 = vpack.c.b16 %v251, %v247
    %v336 = vpack.c.b16 %v252, %v248
    %v337 = vpack.c.b16 %v253, %v249
    %v338 = vpack.c.b16 %v258, %v254
    %v339 = vpack.c.b16 %v259, %v255
    %v340 = vpack.c.b16 %v260, %v256
    %v341 = vpack.c.b16 %v261, %v257
    %v342 = vpack.c.b16 %v266, %v262
    %v343 = vpack.c.b16 %v267, %v263
    %v344 = vpack.c.b16 %v268, %v264
    %v345 = vpack.c.b16 %v269, %v265
    %v346 = vpack.c.b16 %v274, %v270
    %v347 = vpack.c.b16 %v275, %v271
    %v348 = vpack.c.b16 %v276, %v272
    %v349 = vpack.c.b16 %v277, %v273
    %v350 = vpack.c.b16 %v282, %v278
    %v351 = vpack.c.b16 %v283, %v279
    %v352 = vpack.c.b16 %v284, %v280
    %v353 = vpack.c.b16 %v285, %v281
    %v354 = vpack.c.b16 %v290, %v286
    %v355 = vpack.c.b16 %v291, %v287
    %v356 = vpack.c.b16 %v292, %v288
    %v357 = vpack.c.b16 %v293, %v289
    %v423 = vlaneseq
    %v424 = vshrl.u32 %v423, 7
    %v425 = vsub.s32 0, %v424
    %v426 = vrot.slane %v101, %v425
    %v427 = vlaneseq
    %v428 = vshrl.u32 %v427, 7
    %v429 = vsub.s32 1, %v428
    %v430 = vrot.slane %v101, %v429
    %v431 = vlaneseq
    %v432 = vshrl.u32 %v431, 7
    %v433 = vsub.s32 2, %v432
    %v434 = vrot.slane %v101, %v433
    %v435 = vlaneseq
    %v436 = vshrl.u32 %v435, 7
    %v437 = vsub.s32 3, %v436
    %v438 = vrot.slane %v101, %v437
    %443 = vmatprep.subr.bf16.mxu0 %v295
    %444 = vmatpush1.bf16.msra.mxu0 %v294
    %445 = vmatprep.subr.bf16.mxu0 %v299
    %446 = vmatpush1.bf16.msra.mxu0 %v298
    %447 = vmatprep.subr.bf16.mxu0 %v303
    %448 = vmatpush1.bf16.msra.mxu0 %v302
    %449 = vmatprep.subr.bf16.mxu0 %v307
    %450 = vmatpush1.bf16.msra.mxu0 %v306
    %451 = vmatprep.subr.bf16.mxu0 %v311
    %452 = vmatpush1.bf16.msra.mxu0 %v310
    %453 = vmatprep.subr.bf16.mxu0 %v315
    %454 = vmatpush1.bf16.msra.mxu0 %v314
    %455 = vmatprep.subr.bf16.mxu0 %v319
    %456 = vmatpush1.bf16.msra.mxu0 %v318
    %457 = vmatprep.subr.bf16.mxu0 %v323
    %458 = vmatpush1.bf16.msra.mxu0 %v322
    %459 = vmatprep.subr.bf16.mxu0 %v327
    %460 = vmatpush1.bf16.msra.mxu0 %v326
    %461 = vmatprep.subr.bf16.mxu0 %v331
    %462 = vmatpush1.bf16.msra.mxu0 %v330
    %463 = vmatprep.subr.bf16.mxu0 %v335
    %464 = vmatpush1.bf16.msra.mxu0 %v334
    %465 = vmatprep.subr.bf16.mxu0 %v339
    %466 = vmatpush1.bf16.msra.mxu0 %v338
    %467 = vmatprep.subr.bf16.mxu0 %v343
    %468 = vmatpush1.bf16.msra.mxu0 %v342
    %469 = vmatprep.subr.bf16.mxu0 %v347
    %470 = vmatpush1.bf16.msra.mxu0 %v346
    %471 = vmatprep.subr.bf16.mxu0 %v351
    %472 = vmatpush1.bf16.msra.mxu0 %v350
    %473 = vmatprep.subr.bf16.mxu0 %v355
    %474 = vmatpush1.bf16.msra.mxu0 %v354
    %475 = vmatprep.mubr.bf16.mxu0 %v36
    %476 = vmatmul.mubr.bf16.gmra.mrb[0].mxu0 %v35
    %v477 = vpop.f32.mrb[0].mxu0
    %v478 = vadd.f32 %v426, %v477
    %v479 = vpop.f32.mrb[0].mxu0
    %v480 = vadd.f32 %v430, %v479
    %v481 = vpop.f32.mrb[0].mxu0
    %v482 = vpop.f32.mrb[0].mxu0
    %483 = vdwg.mxu0
    %484 = vmatprep.subr.bf16.mxu0 %v297
    %485 = vmatpush1.bf16.msra.mxu0 %v296
    %486 = vmatprep.subr.bf16.mxu0 %v301
    %487 = vmatpush1.bf16.msra.mxu0 %v300
    %488 = vmatprep.subr.bf16.mxu0 %v305
    %489 = vmatpush1.bf16.msra.mxu0 %v304
    %490 = vmatprep.subr.bf16.mxu0 %v309
    %491 = vmatpush1.bf16.msra.mxu0 %v308
    %492 = vmatprep.subr.bf16.mxu0 %v313
    %493 = vmatpush1.bf16.msra.mxu0 %v312
    %494 = vmatprep.subr.bf16.mxu0 %v317
    %495 = vmatpush1.bf16.msra.mxu0 %v316
    %496 = vmatprep.subr.bf16.mxu0 %v321
    %497 = vmatpush1.bf16.msra.mxu0 %v320
    %498 = vmatprep.subr.bf16.mxu0 %v325
    %499 = vmatpush1.bf16.msra.mxu0 %v324
    %500 = vmatprep.subr.bf16.mxu0 %v329
    %501 = vmatpush1.bf16.msra.mxu0 %v328
    %502 = vmatprep.subr.bf16.mxu0 %v333
    %503 = vmatpush1.bf16.msra.mxu0 %v332
    %504 = vmatprep.subr.bf16.mxu0 %v337
    %505 = vmatpush1.bf16.msra.mxu0 %v336
    %506 = vmatprep.subr.bf16.mxu0 %v341
    %507 = vmatpush1.bf16.msra.mxu0 %v340
    %508 = vmatprep.subr.bf16.mxu0 %v345
    %509 = vmatpush1.bf16.msra.mxu0 %v344
    %510 = vmatprep.subr.bf16.mxu0 %v349
    %511 = vmatpush1.bf16.msra.mxu0 %v348
    %512 = vmatprep.subr.bf16.mxu0 %v353
    %513 = vmatpush1.bf16.msra.mxu0 %v352
    %514 = vmatprep.subr.bf16.mxu0 %v357
    %515 = vmatpush1.bf16.msra.mxu0 %v356
    %516 = vmatprep.mubr.bf16.mxu0 %v36
    %517 = vmatmul.mubr.bf16.gmra.mrb[0].mxu0 %v35
    %v518 = vpop.f32.mrb[0].mxu0
    %v519 = vadd.f32 %v434, %v518
    %v520 = vpop.f32.mrb[0].mxu0
    %v521 = vadd.f32 %v438, %v520
    %v522 = vpop.f32.mrb[0].mxu0
    %v523 = vpop.f32.mrb[0].mxu0
    %524 = vdwg.mxu0
    %v525 = vmax.f32 %v478, 0.0
    %v526 = vmax.f32 %v480, 0.0
    %v527 = vmax.f32 %v519, 0.0
    %v528 = vmax.f32 %v521, 0.0
    %v529 = vpack.c.bf16 %v525, %v525
    %v530 = vpack.c.bf16 %v526, %v526
    %v531 = vpack.c.bf16 %v527, %v527
    %v532 = vpack.c.bf16 %v528, %v528
    %v533 = vld [vmem:[%s3] sm:$0xf]
    %v534 = vld [vmem:[%s3 + $0x4] sm:$0xf]
    %v535 = vld [vmem:[%s3 + $0x8] sm:$0xf]
    %v536 = vld [vmem:[%s3 + $0xc] sm:$0xf]
    %v537 = vld [vmem:[%s3 + $0x10] sm:$0xf]
    %v538 = vld [vmem:[%s3 + $0x14] sm:$0xf]
    %v539 = vld [vmem:[%s3 + $0x18] sm:$0xf]
    %v540 = vld [vmem:[%s3 + $0x1c] sm:$0xf]
    %v541 = vld [vmem:[%s3 + $0x20] sm:$0xf]
    %v542 = vld [vmem:[%s3 + $0x24] sm:$0xf]
    %v543 = vld [vmem:[%s3 + $0x28] sm:$0xf]
    %v544 = vld [vmem:[%s3 + $0x2c] sm:$0xf]
    %v545 = vld [vmem:[%s3 + $0x30] sm:$0xf]
    %v546 = vld [vmem:[%s3 + $0x34] sm:$0xf]
    %v547 = vld [vmem:[%s3 + $0x38] sm:$0xf]
    %v548 = vld [vmem:[%s3 + $0x3c] sm:$0xf]
    %v549 = vld [vmem:[%s3 + $0x40] sm:$0xf]
    %v550 = vld [vmem:[%s3 + $0x44] sm:$0xf]
    %v551 = vld [vmem:[%s3 + $0x48] sm:$0xf]
    %v552 = vld [vmem:[%s3 + $0x4c] sm:$0xf]
    %v553 = vld [vmem:[%s3 + $0x50] sm:$0xf]
    %v554 = vld [vmem:[%s3 + $0x54] sm:$0xf]
    %v555 = vld [vmem:[%s3 + $0x58] sm:$0xf]
    %v556 = vld [vmem:[%s3 + $0x5c] sm:$0xf]
    %v557 = vld [vmem:[%s3 + $0x60] sm:$0xf]
    %v558 = vld [vmem:[%s3 + $0x64] sm:$0xf]
    %v559 = vld [vmem:[%s3 + $0x68] sm:$0xf]
    %v560 = vld [vmem:[%s3 + $0x6c] sm:$0xf]
    %v561 = vld [vmem:[%s3 + $0x70] sm:$0xf]
    %v562 = vld [vmem:[%s3 + $0x74] sm:$0xf]
    %v563 = vld [vmem:[%s3 + $0x78] sm:$0xf]
    %v564 = vld [vmem:[%s3 + $0x7c] sm:$0xf]
    %v565 = vld [vmem:[%s3 + $0x80] sm:$0xf]
    %v566 = vld [vmem:[%s3 + $0x84] sm:$0xf]
    %v567 = vld [vmem:[%s3 + $0x88] sm:$0xf]
    %v568 = vld [vmem:[%s3 + $0x8c] sm:$0xf]
    %v569 = vld [vmem:[%s3 + $0x90] sm:$0xf]
    %v570 = vld [vmem:[%s3 + $0x94] sm:$0xf]
    %v571 = vld [vmem:[%s3 + $0x98] sm:$0xf]
    %v572 = vld [vmem:[%s3 + $0x9c] sm:$0xf]
    %v573 = vld [vmem:[%s3 + $0xa0] sm:$0xf]
    %v574 = vld [vmem:[%s3 + $0xa4] sm:$0xf]
    %v575 = vld [vmem:[%s3 + $0xa8] sm:$0xf]
    %v576 = vld [vmem:[%s3 + $0xac] sm:$0xf]
    %v577 = vld [vmem:[%s3 + $0xb0] sm:$0xf]
    %v578 = vld [vmem:[%s3 + $0xb4] sm:$0xf]
    %v579 = vld [vmem:[%s3 + $0xb8] sm:$0xf]
    %v580 = vld [vmem:[%s3 + $0xbc] sm:$0xf]
    %v581 = vld [vmem:[%s3 + $0xc0] sm:$0xf]
    %v582 = vld [vmem:[%s3 + $0xc4] sm:$0xf]
    %v583 = vld [vmem:[%s3 + $0xc8] sm:$0xf]
    %v584 = vld [vmem:[%s3 + $0xcc] sm:$0xf]
    %v585 = vld [vmem:[%s3 + $0xd0] sm:$0xf]
    %v586 = vld [vmem:[%s3 + $0xd4] sm:$0xf]
    %v587 = vld [vmem:[%s3 + $0xd8] sm:$0xf]
    %v588 = vld [vmem:[%s3 + $0xdc] sm:$0xf]
    %v589 = vld [vmem:[%s3 + $0xe0] sm:$0xf]
    %v590 = vld [vmem:[%s3 + $0xe4] sm:$0xf]
    %s591 = sld [smem:[#allocation2]]
    %v592 = vstv %s591
    %v651 = vunpack.c.l.b16 %v533
    %v652 = vunpack.c.l.b16 %v534
    %v653 = vunpack.c.l.b16 %v535
    %v654 = vunpack.c.l.b16 %v536
    %v655 = vunpack.c.l.b16 %v537
    %v656 = vunpack.c.l.b16 %v538
    %v657 = vunpack.c.l.b16 %v539
    %v658 = vunpack.c.l.b16 %v540
    %v659 = vunpack.c.l.b16 %v541
    %v660 = vunpack.c.l.b16 %v542
    %v661 = vunpack.c.l.b16 %v543
    %v662 = vunpack.c.l.b16 %v544
    %v663 = vunpack.c.l.b16 %v545
    %v664 = vunpack.c.l.b16 %v546
    %v665 = vunpack.c.l.b16 %v547
    %v666 = vunpack.c.l.b16 %v548
    %v667 = vunpack.c.l.b16 %v549
    %v668 = vunpack.c.l.b16 %v550
    %v669 = vunpack.c.l.b16 %v551
    %v670 = vunpack.c.l.b16 %v552
    %v671 = vunpack.c.l.b16 %v553
    %v672 = vunpack.c.l.b16 %v554
    %v673 = vunpack.c.l.b16 %v555
    %v674 = vunpack.c.l.b16 %v556
    %v675 = vunpack.c.l.b16 %v557
    %v676 = vunpack.c.l.b16 %v558
    %v677 = vunpack.c.l.b16 %v559
    %v678 = vunpack.c.l.b16 %v560
    %v679 = vunpack.c.l.b16 %v561
    %v680 = vunpack.c.l.b16 %v562
    %v681 = vunpack.c.l.b16 %v563
    %v682 = vunpack.c.l.b16 %v564
    %v683 = vunpack.c.l.b16 %v565
    %v684 = vunpack.c.l.b16 %v566
    %v685 = vunpack.c.l.b16 %v567
    %v686 = vunpack.c.l.b16 %v568
    %v687 = vunpack.c.l.b16 %v569
    %v688 = vunpack.c.l.b16 %v570
    %v689 = vunpack.c.l.b16 %v571
    %v690 = vunpack.c.l.b16 %v572
    %v691 = vunpack.c.l.b16 %v573
    %v692 = vunpack.c.l.b16 %v574
    %v693 = vunpack.c.l.b16 %v575
    %v694 = vunpack.c.l.b16 %v576
    %v695 = vunpack.c.l.b16 %v577
    %v696 = vunpack.c.l.b16 %v578
    %v697 = vunpack.c.l.b16 %v579
    %v698 = vunpack.c.l.b16 %v580
    %v699 = vunpack.c.l.b16 %v581
    %v700 = vunpack.c.l.b16 %v582
    %v701 = vunpack.c.l.b16 %v583
    %v702 = vunpack.c.l.b16 %v584
    %v703 = vunpack.c.l.b16 %v585
    %v704 = vunpack.c.l.b16 %v586
    %v705 = vunpack.c.l.b16 %v587
    %v706 = vunpack.c.l.b16 %v588
    %v707 = vunpack.c.l.b16 %v589
    %v708 = vunpack.c.l.b16 %v590
    %v709 = vpack.c.b16 %v652, %v651
    %v710 = vpack.c.b16 %v654, %v653
    %v711 = vpack.c.b16 %v656, %v655
    %v712 = vpack.c.b16 %v658, %v657
    %v713 = vpack.c.b16 %v660, %v659
    %v714 = vpack.c.b16 %v662, %v661
    %v715 = vpack.c.b16 %v664, %v663
    %v716 = vpack.c.b16 %v666, %v665
    %v717 = vpack.c.b16 %v668, %v667
    %v718 = vpack.c.b16 %v670, %v669
    %v719 = vpack.c.b16 %v672, %v671
    %v720 = vpack.c.b16 %v674, %v673
    %v721 = vpack.c.b16 %v676, %v675
    %v722 = vpack.c.b16 %v678, %v677
    %v723 = vpack.c.b16 %v680, %v679
    %v724 = vpack.c.b16 %v682, %v681
    %v725 = vpack.c.b16 %v684, %v683
    %v726 = vpack.c.b16 %v686, %v685
    %v727 = vpack.c.b16 %v688, %v687
    %v728 = vpack.c.b16 %v690, %v689
    %v729 = vpack.c.b16 %v692, %v691
    %v730 = vpack.c.b16 %v694, %v693
    %v731 = vpack.c.b16 %v696, %v695
    %v732 = vpack.c.b16 %v698, %v697
    %v733 = vpack.c.b16 %v700, %v699
    %v734 = vpack.c.b16 %v702, %v701
    %v735 = vpack.c.b16 %v704, %v703
    %v736 = vpack.c.b16 %v706, %v705
    %v737 = vpack.c.b16 %v708, %v707
    %vm767 = vcmask 654336
    %v769 = vsel %vm767, %v532, 0
    %771 = vmatprep.subr.bf16.mxu0 0
    %772 = vmatpush1.bf16.msra.mxu0 %v709
    %773 = vmatprep.subr.bf16.mxu0 0
    %774 = vmatpush1.bf16.msra.mxu0 %v710
    %775 = vmatprep.subr.bf16.mxu0 0
    %776 = vmatpush1.bf16.msra.mxu0 %v711
    %777 = vmatprep.subr.bf16.mxu0 0
    %778 = vmatpush1.bf16.msra.mxu0 %v712
    %779 = vmatprep.subr.bf16.mxu0 0
    %780 = vmatpush1.bf16.msra.mxu0 %v713
    %781 = vmatprep.subr.bf16.mxu0 0
    %782 = vmatpush1.bf16.msra.mxu0 %v714
    %783 = vmatprep.subr.bf16.mxu0 0
    %784 = vmatpush1.bf16.msra.mxu0 %v715
    %785 = vmatprep.subr.bf16.mxu0 0
    %786 = vmatpush1.bf16.msra.mxu0 %v716
    %787 = vmatprep.subr.bf16.mxu0 0
    %788 = vmatpush1.bf16.msra.mxu0 %v717
    %789 = vmatprep.subr.bf16.mxu0 0
    %790 = vmatpush1.bf16.msra.mxu0 %v718
    %791 = vmatprep.subr.bf16.mxu0 0
    %792 = vmatpush1.bf16.msra.mxu0 %v719
    %793 = vmatprep.subr.bf16.mxu0 0
    %794 = vmatpush1.bf16.msra.mxu0 %v720
    %795 = vmatprep.subr.bf16.mxu0 0
    %796 = vmatpush1.bf16.msra.mxu0 %v721
    %797 = vmatprep.subr.bf16.mxu0 0
    %798 = vmatpush1.bf16.msra.mxu0 %v722
    %799 = vmatprep.subr.bf16.mxu0 0
    %800 = vmatpush1.bf16.msra.mxu0 %v723
    %801 = vmatprep.subr.bf16.mxu0 0
    %802 = vmatpush1.bf16.msra.mxu0 %v724
    %803 = vmatprep.mubr.bf16.mxu0 %v530
    %804 = vmatmul.mubr.bf16.gmra.mrb[0].mxu0 %v529
    %v805 = vpop.f32.mrb[0].mxu0
    %v806 = vadd.f32 %v592, %v805
    %v807 = vpop.f32.mrb[0].mxu0
    %v808 = vpop.f32.mrb[0].mxu0
    %v809 = vpop.f32.mrb[0].mxu0
    %810 = vdwg.mxu0
    %811 = vmatprep.subr.bf16.mxu0 0
    %812 = vmatpush1.bf16.msra.mxu0 %v725
    %813 = vmatprep.subr.bf16.mxu0 0
    %814 = vmatpush1.bf16.msra.mxu0 %v726
    %815 = vmatprep.subr.bf16.mxu0 0
    %816 = vmatpush1.bf16.msra.mxu0 %v727
    %817 = vmatprep.subr.bf16.mxu0 0
    %818 = vmatpush1.bf16.msra.mxu0 %v728
    %819 = vmatprep.subr.bf16.mxu0 0
    %820 = vmatpush1.bf16.msra.mxu0 %v729
    %821 = vmatprep.subr.bf16.mxu0 0
    %822 = vmatpush1.bf16.msra.mxu0 %v730
    %823 = vmatprep.subr.bf16.mxu0 0
    %824 = vmatpush1.bf16.msra.mxu0 %v731
    %825 = vmatprep.subr.bf16.mxu0 0
    %826 = vmatpush1.bf16.msra.mxu0 %v732
    %827 = vmatprep.subr.bf16.mxu0 0
    %828 = vmatpush1.bf16.msra.mxu0 %v733
    %829 = vmatprep.subr.bf16.mxu0 0
    %830 = vmatpush1.bf16.msra.mxu0 %v734
    %831 = vmatprep.subr.bf16.mxu0 0
    %832 = vmatpush1.bf16.msra.mxu0 %v735
    %833 = vmatprep.subr.bf16.mxu0 0
    %834 = vmatpush1.bf16.msra.mxu0 %v736
    %835 = vmatprep.subr.bf16.mxu0 0
    %836 = vmatpush1.bf16.msra.mxu0 %v737
    %837 = vmatprep.subr.bf16.mxu0 0
    %838 = vmatpush1.bf16.msra.mxu0 0
    %839 = vmatprep.subr.bf16.mxu0 0
    %840 = vmatpush1.bf16.msra.mxu0 0
    %841 = vmatprep.subr.bf16.mxu0 0
    %842 = vmatpush1.bf16.msra.mxu0 0
    %843 = vmatprep.mubr.bf16.mxu0 %v769
    %844 = vmatmul.mubr.bf16.gmra.mrb[0].mxu0 %v531
    %v845 = vpop.f32.mrb[0].mxu0
    %v846 = vadd.f32 %v806, %v845
    %v847 = vpop.f32.mrb[0].mxu0
    %v848 = vpop.f32.mrb[0].mxu0
    %v849 = vpop.f32.mrb[0].mxu0
    %850 = vdwg.mxu0
    %vm851 = vcmask 57344
    %852 = vst.msk [vmem:[#allocation3] sm:$0x1] %vm851, %v846
    // Predicated region
    $region22: #{fc1_forward.1} parent=1 // pred_check
      _
    $region23: #{fc1_forward.1} parent=1 // pred_check_branch
      %854 = sbr.rel (0) target = $region25
    $region24: #{fc1_forward.1} parent=1 // pred_region
      %s856 = ssub.s32 16, 16
      %857 = vsyncadd [#allocation4], %s856
      %s859 = sshll.u32 [#allocation3], 4
      %s860 = int_to_ptr.vmem [resolvable:$true] %s859
      %862 = dma.vmem_to_hbm [thread:$0]  %s860, 16, %s5, [#allocation4]
    $region25: #{fc1_forward.1} parent=1 // pred_fallthru
      _
    // Predicated region
    $region26: #{fc1_forward.1} parent=1 // pred_check
      _
    $region27: #{fc1_forward.1} parent=1 // pred_check_branch
      %864 = sbr.rel (0) target = $region29
    $region28: #{fc1_forward.1} parent=1 // pred_region
      %865 = dma.done [#allocation4], 16
    $region29: #{fc1_forward.1} parent=1 // pred_fallthru
      _
    %866 = vsyncpa [#allocation4], 1

</llo_original>
